<compile_context>
chip_gen: v7x
topology: tpu7x:2x2x1
jax: 0.10.0
libtpu: 0.0.40
codegen_flags: <defaults>
</compile_context>

<pallas_src>
import functools

import jax
import jax.numpy as jnp
from jax.experimental import pallas as pl
from jax.experimental.pallas import tpu as pltpu


def _round_up(x, m):
    return ((x + m - 1) // m) * m


def _vmem_capacity_bytes():
    """Best-effort VMEM capacity query; conservative (v7x 64 MiB) fallback."""
    try:
        info = pltpu.get_tpu_info()
        cap = getattr(info, "vmem_capacity_bytes", None)
        if cap:
            return int(cap)
    except Exception:
        pass
    return 64 * 1024 * 1024


# ---------------------------------------------------------------------------
# Kernels
# ---------------------------------------------------------------------------
def _linear_kernel_f32_out(x_ref, w_ref, b_ref, o_ref):
    """f32 output: accumulate directly into the k-invariant output block."""
    # x_ref: (tm, tk), w_ref: (tk, tn), b_ref: (1, tn), o_ref: (tm, tn) f32
    @pl.when(pl.program_id(2) == 0)
    def _():
        o_ref[...] = jnp.broadcast_to(
            b_ref[...].astype(jnp.float32), o_ref.shape
        )

    o_ref[...] += jnp.dot(
        x_ref[...], w_ref[...], preferred_element_type=jnp.float32
    )


def _linear_kernel_lowp_out(x_ref, w_ref, b_ref, o_ref, acc_ref):
    """Low-precision output: f32 VMEM accumulator + cast at k==last."""
    k = pl.program_id(2)

    @pl.when(k == 0)
    def _():
        acc_ref[...] = jnp.broadcast_to(
            b_ref[...].astype(jnp.float32), acc_ref.shape
        )

    acc_ref[...] += jnp.dot(
        x_ref[...], w_ref[...], preferred_element_type=jnp.float32
    )

    @pl.when(k == pl.num_programs(2) - 1)
    def _():
        o_ref[...] = acc_ref[...].astype(o_ref.dtype)


# ---------------------------------------------------------------------------
# Module wrapper (params prepared once, forward is pad-free for W / b)
# ---------------------------------------------------------------------------
class MLRPallas:
    """Pallas equivalent of MLR (a single nn.Linear): y = x @ W^T + b."""

    def __init__(self, weight, bias, *, compute_dtype=jnp.bfloat16):
        out_dim, in_dim = weight.shape
        assert bias.shape == (out_dim,)
        self.in_dim = int(in_dim)
        self.out_dim = int(out_dim)
        self.compute_dtype = jnp.dtype(compute_dtype)

        # --- generation-aware tile / VMEM constants --------------------------
        vmem_cap = _vmem_capacity_bytes()
        if vmem_cap >= 128 * 1024 * 1024:       # v5e / v6e
            tm, tn, tk = 512, 1024, 1024
            self.vmem_limit = 96 * 1024 * 1024
        else:                                   # v7x (64 MiB per TensorCore)
            tm, tn, tk = 512, 512, 1024
            self.vmem_limit = 48 * 1024 * 1024

        # Clamp tiles to the (8,128)-aligned problem so small shapes still
        # satisfy the block constraints (defaults are already 256-multiples).
        self.tm = tm
        self.tn = min(tn, _round_up(self.out_dim, 128))
        self.tk = min(tk, _round_up(self.in_dim, 128))
        self.n_pad = _round_up(self.out_dim, self.tn)
        self.k_pad = _round_up(self.in_dim, self.tk)

        # --- one-time parameter preparation (no per-call jnp.pad of W) -------
        w = weight.astype(self.compute_dtype)
        if self.n_pad != self.out_dim or self.k_pad != self.in_dim:
            w = jnp.pad(
                w, ((0, self.n_pad - self.out_dim), (0, self.k_pad - self.in_dim))
            )
        # Pre-transpose to (K, N): canonical contraction, lane dim is N.
        self.w_t = jnp.asarray(w.T)             # (k_pad, n_pad), compute_dtype

        b = bias.astype(jnp.float32)            # bias stays f32 (tiny, exact add)
        if self.n_pad != self.out_dim:
            b = jnp.pad(b, (0, self.n_pad - self.out_dim))
        self.b_p = b.reshape(1, self.n_pad)

    @functools.partial(jax.jit, static_argnums=0)
    def __call__(self, x):
        B, in_dim = x.shape
        assert in_dim == self.in_dim
        out_dtype = jnp.dtype(x.dtype)

        tm = min(self.tm, _round_up(B, 8))
        m_pad = _round_up(B, tm)

        xc = x.astype(self.compute_dtype)
        if m_pad != B or self.k_pad != in_dim:
            xc = jnp.pad(xc, ((0, m_pad - B), (0, self.k_pad - in_dim)))

        grid = (m_pad // tm, self.n_pad // self.tn, self.k_pad // self.tk)

        if out_dtype == jnp.dtype(jnp.float32):
            kernel = _linear_kernel_f32_out
            scratch_shapes = []
        else:
            kernel = _linear_kernel_lowp_out
            scratch_shapes = [pltpu.VMEM((tm, self.tn), jnp.float32)]

        tn, tk = self.tn, self.tk
        out_p = pl.pallas_call(
            kernel,
            out_shape=jax.ShapeDtypeStruct((m_pad, self.n_pad), out_dtype),
            grid_spec=pltpu.PrefetchScalarGridSpec(
                num_scalar_prefetch=0,
                grid=grid,
                in_specs=[
                    pl.BlockSpec((tm, tk), lambda i, j, k: (i, k)),  # x tile
                    pl.BlockSpec((tk, tn), lambda i, j, k: (k, j)),  # W^T tile
                    pl.BlockSpec((1, tn), lambda i, j, k: (0, j)),   # bias tile
                ],
                out_specs=pl.BlockSpec((tm, tn), lambda i, j, k: (i, j)),
                scratch_shapes=scratch_shapes,
            ),
            compiler_params=pltpu.CompilerParams(
                dimension_semantics=("parallel", "parallel", "arbitrary"),
                vmem_limit_bytes=self.vmem_limit,
            ),
        )(xc, self.w_t, self.b_p)

        if m_pad != B or self.n_pad != self.out_dim:
            out_p = out_p[:B, : self.out_dim]
        return out_p


# ---------------------------------------------------------------------------
# Demo / correctness check
# ---------------------------------------------------------------------------
if __name__ == "__main__":
    key = jax.random.PRNGKey(0)
    kx, kw, kb = jax.random.split(key, 3)

    batch, inp_dim, out_dim = 8, 32, 16

    x = jax.random.normal(kx, (batch, inp_dim), dtype=jnp.float32)
    # Deterministic "nn.Linear"-style params (uniform in +-1/sqrt(inp_dim)).
    bound = 1.0 / (inp_dim ** 0.5)
    weight = jax.random.uniform(kw, (out_dim, inp_dim), jnp.float32, -bound, bound)
    bias = jax.random.uniform(kb, (out_dim,), jnp.float32, -bound, bound)

    ref = x @ weight.T + bias

    # f32 compute path: bit-accurate-ish check of the kernel math.
    mlr_f32 = MLRPallas(weight, bias, compute_dtype=jnp.float32)
    out_f32 = jax.block_until_ready(mlr_f32(x))
    assert out_f32.shape == (batch, out_dim)
    assert out_f32.dtype == jnp.float32
    assert jnp.allclose(out_f32, ref, atol=1e-5, rtol=1e-5)

    # Default bf16 compute path (f32 accumulate): looser tolerance.
    mlr_bf16 = MLRPallas(weight, bias)  # compute_dtype=bfloat16
    out_bf16 = jax.block_until_ready(mlr_bf16(x))
    assert out_bf16.shape == (batch, out_dim)
    assert out_bf16.dtype == jnp.float32
    assert jnp.allclose(out_bf16, ref, atol=5e-2, rtol=5e-2)

    print("KERNEL_OK")
</pallas_src>

<mosaic_0001>
module attributes {stable_mosaic.version = 11 : i64} {
  func.func @_linear_kernel_f32_out(%arg0: i32, %arg1: i32, %arg2: i32, %arg3: memref<8x128xf32, #tpu.memory_space<vmem>>, %arg4: memref<128x128xf32, #tpu.memory_space<vmem>>, %arg5: memref<1x128xf32, #tpu.memory_space<vmem>>, %arg6: memref<8x128xf32, #tpu.memory_space<vmem>>) attributes {dimension_semantics = [#tpu.dimension_semantics<parallel>, #tpu.dimension_semantics<parallel>, #tpu.dimension_semantics<arbitrary>], iteration_bounds = array<i64: 1, 1, 1>, scalar_prefetch = 0 : i64, scratch_operands = 0 : i64, tpu.core_type = #tpu.core_type<tc>, window_params = [{transform_indices = @transform_0, window_bounds = array<i64: 8, 128>}, {transform_indices = @transform_1, window_bounds = array<i64: 128, 128>}, {transform_indices = @transform_2, window_bounds = array<i64: 1, 128>}, {transform_indices = @transform_3, window_bounds = array<i64: 8, 128>}]} {
    %c0_i32 = arith.constant 0 : i32
    %0 = arith.cmpi eq, %arg2, %c0_i32 : i32
    %1 = arith.extui %0 : i1 to i32
    %c0_i32_0 = arith.constant 0 : i32
    %2 = arith.cmpi ne, %1, %c0_i32_0 : i32
    scf.if %2 {
      %c0_8 = arith.constant 0 : index
      %c0_9 = arith.constant 0 : index
      %9 = vector.load %arg5[%c0_8, %c0_9] : memref<1x128xf32, #tpu.memory_space<vmem>>, vector<1x128xf32>
      %10 = vector.shape_cast %9 : vector<1x128xf32> to vector<1x128xf32>
      %11 = vector.broadcast %10 : vector<1x128xf32> to vector<8x128xf32>
      %c0_10 = arith.constant 0 : index
      %c0_11 = arith.constant 0 : index
      %12 = vector.load %arg6[%c0_10, %c0_11] : memref<8x128xf32, #tpu.memory_space<vmem>>, vector<8x128xf32>
      tpu.vector_store %arg6[%c0_10, %c0_11], %11 {strides = array<i32>} : memref<8x128xf32, #tpu.memory_space<vmem>>, vector<8x128xf32>,
    } else {
    }
    %c0 = arith.constant 0 : index
    %c0_1 = arith.constant 0 : index
    %3 = vector.load %arg6[%c0, %c0_1] : memref<8x128xf32, #tpu.memory_space<vmem>>, vector<8x128xf32>
    %c0_2 = arith.constant 0 : index
    %c0_3 = arith.constant 0 : index
    %4 = vector.load %arg3[%c0_2, %c0_3] : memref<8x128xf32, #tpu.memory_space<vmem>>, vector<8x128xf32>
    %c0_4 = arith.constant 0 : index
    %c0_5 = arith.constant 0 : index
    %5 = vector.load %arg4[%c0_4, %c0_5] : memref<128x128xf32, #tpu.memory_space<vmem>>, vector<128x128xf32>
    %cst = arith.constant dense<0.000000e+00> : vector<8x128xf32>
    %6 = tpu.matmul %4, %5, %cst {dimension_numbers = #tpu.dot_dimension_numbers<[1], [0], [0], [1], [0, 0, 1, 1], [], []>} : vector<8x128xf32>, vector<128x128xf32>, vector<8x128xf32> -> vector<8x128xf32>
    %7 = arith.addf %3, %6 : vector<8x128xf32>
    %c0_6 = arith.constant 0 : index
    %c0_7 = arith.constant 0 : index
    %8 = vector.load %arg6[%c0_6, %c0_7] : memref<8x128xf32, #tpu.memory_space<vmem>>, vector<8x128xf32>
    tpu.vector_store %arg6[%c0_6, %c0_7], %7 {strides = array<i32>} : memref<8x128xf32, #tpu.memory_space<vmem>>, vector<8x128xf32>,
    return
  }
  func.func @transform_0(%arg0: i32, %arg1: i32, %arg2: i32) -> (i32, i32) {
    %c0_i32 = arith.constant 0 : i32
    return %arg0, %arg2 : i32, i32
  }
  func.func @transform_1(%arg0: i32, %arg1: i32, %arg2: i32) -> (i32, i32) {
    %c0_i32 = arith.constant 0 : i32
    return %arg2, %arg1 : i32, i32
  }
  func.func @transform_2(%arg0: i32, %arg1: i32, %arg2: i32) -> (i32, i32) {
    %c0_i32 = arith.constant 0 : i32
    %c0_i32_0 = arith.constant 0 : i32
    return %c0_i32, %arg1 : i32, i32
  }
  func.func @transform_3(%arg0: i32, %arg1: i32, %arg2: i32) -> (i32, i32) {
    %c0_i32 = arith.constant 0 : i32
    return %arg0, %arg1 : i32, i32
  }
}

</mosaic_0001>

<llo_original>
// kernel: a_call__.1
$region0: #{a_call__.1}
  #allocation0 [shape = 'u32[]', space=smem, size = 0x4, offset = 0x4, fixed_abs, tag = 'smem constant byte address 0x4 - core index']
  #allocation1 [shape = 'u32[144,128]{1,0:T(1,128)}', space=vmem, size = 0x12000, scoped, tag = 'internal scratch']
  %s0 = inlined_call_operand.vmem [shape: f32[8,128], index: 0, kind: input, shape index: {}]
  %s1 = inlined_call_operand.hbm [shape: f32[128,128], index: 1, kind: input, shape index: {}]
  %s2 = inlined_call_operand.vmem [shape: f32[1,128], index: 2, kind: input, shape index: {}]
  %s3 = inlined_call_operand.hbm [shape: f32[8,128], index: 3, kind: output, shape index: {}]
  %s4 = sld [smem:[#allocation0]]
  $region30: #{a_call__.1} parent=0
    _
  %s6 = ssub.s32 1, %s4
  %s7 = scalar_select 0, %s6, %s4
  $region1: #{a_call__.1} parent=0
    #allocation2 [shape = 'u8[65536]{0}', space=vmem, size = 0x10000, scoped, tag = 'input window, operand 1, single buffered']
    #allocation3 [shape = 's32[1]{0}', space=sflag, size = 0x4, scoped, tag = 'scoped memory for a_call__.1']
    #allocation4 [shape = 's32[1]{0}', space=sflag, size = 0x4, scoped, tag = 'scoped memory for a_call__.1']
    #allocation5 [shape = 'u8[4096]{0}', space=vmem, size = 0x1000, scoped, tag = 'output window, operand 0, single buffered']
    %8 = vsyncpa [#allocation3], 0
    %9 = vsyncpa [#allocation4], 0
    // Predicated region
    $region2: #{a_call__.1} parent=1 // pred_check
      _
    $region3: #{a_call__.1} parent=1 // pred_check_branch
      %11 = sbr.rel (0) target = $region5
    $region4: #{a_call__.1} parent=1 // pred_region
      _
    $region5: #{a_call__.1} parent=1 // pred_fallthru
      _
    // Predicated region
    $region6: #{a_call__.1} parent=1 // pred_check
      _
    $region7: #{a_call__.1} parent=1 // pred_check_branch
      %13 = sbr.rel (0) target = $region9
    $region8: #{a_call__.1} parent=1 // pred_region
      %s15 = ssub.s32 2048, 2048
      %16 = vsyncadd [#allocation3], %s15
      %s17 = sshll.u32 [#allocation2], 4
      %s18 = int_to_ptr.vmem [resolvable:$true] %s17
      %23 = dma.hbm_to_vmem [thread:$0]  %s1, 2048, %s18, [#allocation3], 128, 128, 8
    $region9: #{a_call__.1} parent=1 // pred_fallthru
      _
    // Predicated region
    $region10: #{a_call__.1} parent=1 // pred_check
      _
    $region11: #{a_call__.1} parent=1 // pred_check_branch
      %25 = sbr.rel (0) target = $region13
    $region12: #{a_call__.1} parent=1 // pred_region
      _
    $region13: #{a_call__.1} parent=1 // pred_fallthru
      _
    // Predicated region
    $region14: #{a_call__.1} parent=1 // pred_check
      _
    $region15: #{a_call__.1} parent=1 // pred_check_branch
      %27 = sbr.rel (0) target = $region17
    $region16: #{a_call__.1} parent=1 // pred_region
      %28 = dma.done [#allocation3], 2048
    $region17: #{a_call__.1} parent=1 // pred_fallthru
      _
    %p29 = scmp.eq.s32.totalorder 0, 0
    // Predicated region
    $region18: #{a_call__.1} parent=1 // pred_check
      %p30 = pneg %p29
    $region19: #{a_call__.1} parent=1 // pred_check_branch
      %32 = sbr.rel (%p30) target = $region21
    $region20: #{a_call__.1} parent=1 // pred_region
      %v33 = vld [vmem:[%s2] sm:$0x1]
      %v35 = vlaneseq
      %v36 = vshrl.u32 %v35, 7
      %v37 = vsub.s32 0, %v36
      %v38 = vrot.slane %v33, %v37
      %40 = vst [vmem:[#allocation5] sm:$0xff] %v38
    $region21: #{a_call__.1} parent=1 // pred_fallthru
      _
    %v41 = vld [vmem:[#allocation5] sm:$0xff]
    %v42 = vld [vmem:[%s0] sm:$0xff]
    %v43 = vld [vmem:[#allocation2] sm:$0xff]
    %v44 = vld [vmem:[#allocation2 + $0x8] sm:$0xff]
    %v45 = vld [vmem:[#allocation2 + $0x10] sm:$0xff]
    %v46 = vld [vmem:[#allocation2 + $0x18] sm:$0xff]
    %v47 = vld [vmem:[#allocation2 + $0x20] sm:$0xff]
    %v48 = vld [vmem:[#allocation2 + $0x28] sm:$0xff]
    %v49 = vld [vmem:[#allocation2 + $0x30] sm:$0xff]
    %v50 = vld [vmem:[#allocation2 + $0x38] sm:$0xff]
    %v51 = vld [vmem:[#allocation2 + $0x40] sm:$0xff]
    %v52 = vld [vmem:[#allocation2 + $0x48] sm:$0xff]
    %v53 = vld [vmem:[#allocation2 + $0x50] sm:$0xff]
    %v54 = vld [vmem:[#allocation2 + $0x58] sm:$0xff]
    %v55 = vld [vmem:[#allocation2 + $0x60] sm:$0xff]
    %v56 = vld [vmem:[#allocation2 + $0x68] sm:$0xff]
    %v57 = vld [vmem:[#allocation2 + $0x70] sm:$0xff]
    %v58 = vld [vmem:[#allocation2 + $0x78] sm:$0xff]
    %59 = vmatprep.subr.mxu0 0.0
    %60 = vmatpush1.msra.mxu0 %v43
    %61 = vmatprep.subr.mxu0 0.0
    %62 = vmatpush1.msra.mxu0 %v44
    %63 = vmatprep.subr.mxu0 0.0
    %64 = vmatpush1.msra.mxu0 %v45
    %65 = vmatprep.subr.mxu0 0.0
    %66 = vmatpush1.msra.mxu0 %v46
    %67 = vmatprep.subr.mxu0 0.0
    %68 = vmatpush1.msra.mxu0 %v47
    %69 = vmatprep.subr.mxu0 0.0
    %70 = vmatpush1.msra.mxu0 %v48
    %71 = vmatprep.subr.mxu0 0.0
    %72 = vmatpush1.msra.mxu0 %v49
    %73 = vmatprep.subr.mxu0 0.0
    %74 = vmatpush1.msra.mxu0 %v50
    %75 = vmatprep.subr.mxu0 0.0
    %76 = vmatpush1.msra.mxu0 %v51
    %77 = vmatprep.subr.mxu0 0.0
    %78 = vmatpush1.msra.mxu0 %v52
    %79 = vmatprep.subr.mxu0 0.0
    %80 = vmatpush1.msra.mxu0 %v53
    %81 = vmatprep.subr.mxu0 0.0
    %82 = vmatpush1.msra.mxu0 %v54
    %83 = vmatprep.subr.mxu0 0.0
    %84 = vmatpush1.msra.mxu0 %v55
    %85 = vmatprep.subr.mxu0 0.0
    %86 = vmatpush1.msra.mxu0 %v56
    %87 = vmatprep.subr.mxu0 0.0
    %88 = vmatpush1.msra.mxu0 %v57
    %89 = vmatprep.subr.mxu0 0.0
    %90 = vmatpush1.msra.mxu0 %v58
    %91 = vmatprep.subr.mxu0 0.0
    %92 = vmatpush1.msra.mxu0 0.0
    %93 = vmatprep.subr.mxu0 0.0
    %94 = vmatpush1.msra.mxu0 0.0
    %95 = vmatprep.subr.mxu0 0.0
    %96 = vmatpush1.msra.mxu0 0.0
    %97 = vmatprep.subr.mxu0 0.0
    %98 = vmatpush1.msra.mxu0 0.0
    %99 = vmatprep.subr.mxu0 0.0
    %100 = vmatpush1.msra.mxu0 0.0
    %101 = vmatprep.subr.mxu0 0.0
    %102 = vmatpush1.msra.mxu0 0.0
    %103 = vmatprep.subr.mxu0 0.0
    %104 = vmatpush1.msra.mxu0 0.0
    %105 = vmatprep.subr.mxu0 0.0
    %106 = vmatpush1.msra.mxu0 0.0
    %107 = vmatprep.subr.mxu0 0.0
    %108 = vmatpush1.msra.mxu0 0.0
    %109 = vmatprep.subr.mxu0 0.0
    %110 = vmatpush1.msra.mxu0 0.0
    %111 = vmatprep.subr.mxu0 0.0
    %112 = vmatpush1.msra.mxu0 0.0
    %113 = vmatprep.subr.mxu0 0.0
    %114 = vmatpush1.msra.mxu0 0.0
    %115 = vmatprep.subr.mxu0 0.0
    %116 = vmatpush1.msra.mxu0 0.0
    %117 = vmatprep.subr.mxu0 0.0
    %118 = vmatpush1.msra.mxu0 0.0
    %119 = vmatprep.subr.mxu0 0.0
    %120 = vmatpush1.msra.mxu0 0.0
    %121 = vmatprep.subr.mxu0 0.0
    %122 = vmatpush1.msra.mxu0 0.0
    %123 = vmatprep.mubr.f32.mxu0 0.0
    %124 = vmatmul.mubr.f32.gmra.mrb[0].mxu0 %v42
    %v125 = vpop.f32.mrb[0].mxu0
    %v126 = vadd.f32 0.0, %v125
    %v127 = vpop.f32.mrb[0].mxu0
    %128 = vdwg.mxu0
    %v129 = vadd.f32 %v41, %v126
    %130 = vst [vmem:[#allocation5] sm:$0xff] %v129
    // Predicated region
    $region22: #{a_call__.1} parent=1 // pred_check
      _
    $region23: #{a_call__.1} parent=1 // pred_check_branch
      %132 = sbr.rel (0) target = $region25
    $region24: #{a_call__.1} parent=1 // pred_region
      %s134 = ssub.s32 128, 128
      %135 = vsyncadd [#allocation4], %s134
      %s137 = sshll.u32 [#allocation5], 4
      %s138 = int_to_ptr.vmem [resolvable:$true] %s137
      %140 = dma.vmem_to_hbm [thread:$0]  %s138, 128, %s3, [#allocation4]
    $region25: #{a_call__.1} parent=1 // pred_fallthru
      _
    // Predicated region
    $region26: #{a_call__.1} parent=1 // pred_check
      _
    $region27: #{a_call__.1} parent=1 // pred_check_branch
      %142 = sbr.rel (0) target = $region29
    $region28: #{a_call__.1} parent=1 // pred_region
      %143 = dma.done [#allocation4], 128
    $region29: #{a_call__.1} parent=1 // pred_fallthru
      _
    %144 = vsyncpa [#allocation3], 1
    %145 = vsyncpa [#allocation4], 1

</llo_original>
